<compile_context>
chip_gen: v5e
topology: v5e:2x2
jax: 0.10.0
libtpu: 0.0.40
codegen_flags: <defaults>
</compile_context>

<pallas_src>
import math

import jax
import jax.numpy as jnp
from jax.experimental import pallas as pl
from jax.experimental.pallas import tpu as pltpu

BATCH = 2
SEQ = 8
EMBED_DIM = 32
NUM_HEADS = 4


# ---------------- Pallas kernel: full multi-head self-attention ----------------
def self_attention_kernel(x_ref, wqkv_ref, bqkv_ref, wo_ref, bo_ref, out_ref):
    # x_ref:    (B, S, E)
    # wqkv_ref: (H, E, 3*hd)   fused [Wq*scale | Wk | Wv] per head
    # bqkv_ref: (H, 1, 3*hd)   fused [bq*scale | bk | bv] per head
    # wo_ref:   (H, hd, E)
    # bo_ref:   (1, E)
    # out_ref:  (B, S, E)
    B, S, E = x_ref.shape
    H, _, three_hd = wqkv_ref.shape
    hd = three_hd // 3
    BH = B * H

    x = x_ref[...].astype(jnp.float32)                                   # (B, S, E)
    # Replicate activations across the head axis -> fused (B*H) batch dim
    # (leading-dim broadcast/reshape only; lane/sublane layout untouched).
    x_bh = jnp.broadcast_to(x[:, None], (B, H, S, E)).reshape(BH, S, E)

    def tile_heads(w):
        # (H, ...) -> (B*H, ...), matching the (b*H + h) ordering of x_bh.
        return jnp.broadcast_to(w[None], (B,) + w.shape).reshape((BH,) + w.shape[1:])

    w_qkv = tile_heads(wqkv_ref[...].astype(jnp.float32))                 # (BH, E, 3hd)
    b_qkv = tile_heads(bqkv_ref[...].astype(jnp.float32))                 # (BH, 1, 3hd)
    wo = tile_heads(wo_ref[...].astype(jnp.float32))                      # (BH, hd, E)

    # Fused Q/K/V projection: one batched matmul (attention scale already
    # folded into the Q block of the weights/bias in the wrapper).
    qkv = jnp.einsum('bse,bed->bsd', x_bh, w_qkv,
                     preferred_element_type=jnp.float32) + b_qkv          # (BH, S, 3hd)
    q = qkv[:, :, 0:hd]                                                   # (BH, S, hd)
    k = qkv[:, :, hd:2 * hd]
    v = qkv[:, :, 2 * hd:3 * hd]

    # Attention scores: contract on the last dim of both operands (no k.T).
    s = jnp.einsum('bqd,bkd->bqk', q, k,
                   preferred_element_type=jnp.float32)                    # (BH, S, S)
    s = s - jnp.max(s, axis=-1, keepdims=True)
    p = jnp.exp(s)
    attn = p * pl.reciprocal(jnp.sum(p, axis=-1, keepdims=True), approx=True)

    ctx = jnp.einsum('bqk,bkd->bqd', attn, v,
                     preferred_element_type=jnp.float32)                  # (BH, S, hd)

    # Output projection: per-head partial products, then reduce over heads
    # (leading-dim reshape is free; the reduction is plain VPU adds).
    y = jnp.einsum('bsd,bde->bse', ctx, wo,
                   preferred_element_type=jnp.float32)                    # (BH, S, E)
    bo = bo_ref[...].astype(jnp.float32)                                  # (1, E)
    out = y.reshape(B, H, S, E).sum(axis=1) + bo                          # (B, S, E)
    out_ref[...] = out.astype(out_ref.dtype)


# ---------------- wrapper ----------------
def self_attention_pallas(x, wq, bq, wk, bk, wv, bv, wo, bo, *, num_heads=NUM_HEADS):
    """Multi-head self-attention matching PyTorch SelfAttention.forward.

    x: (B, S, E) float32. Linear weights stored (in, out) so y = x @ W + b.
    """
    B, S, E = x.shape
    H = num_heads
    hd = E // H
    scale = 1.0 / math.sqrt(hd)

    # Wrapper-side weight prep (tiny, constant-foldable): fold the attention
    # scale into the Q projection, split every projection per head, and fuse
    # Q/K/V along the output axis so the kernel does one projection matmul.
    wq_h = (wq * scale).reshape(E, H, hd).transpose(1, 0, 2)              # (H, E, hd)
    wk_h = wk.reshape(E, H, hd).transpose(1, 0, 2)                        # (H, E, hd)
    wv_h = wv.reshape(E, H, hd).transpose(1, 0, 2)                        # (H, E, hd)
    w_qkv_h = jnp.concatenate([wq_h, wk_h, wv_h], axis=-1)                # (H, E, 3hd)

    bq_h = (bq * scale).reshape(H, hd)
    bk_h = bk.reshape(H, hd)
    bv_h = bv.reshape(H, hd)
    b_qkv_h = jnp.concatenate([bq_h, bk_h, bv_h], axis=-1)[:, None, :]    # (H, 1, 3hd)

    wo_h = wo.reshape(H, hd, E)                                           # (H, hd, E)
    bo_2 = bo.reshape(1, E)                                               # (1, E)

    flops = 4 * 2 * B * S * E * E + 2 * 2 * B * H * S * S * hd
    bytes_accessed = 4 * (2 * B * S * E + 4 * E * E + 4 * E)
    cost = pl.CostEstimate(flops=flops,
                           transcendentals=B * H * S * S,
                           bytes_accessed=bytes_accessed)

    vmem = pl.BlockSpec(memory_space=pltpu.MemorySpace.VMEM)
    fn = pl.pallas_call(
        self_attention_kernel,
        out_shape=jax.ShapeDtypeStruct((B, S, E), x.dtype),
        in_specs=[vmem] * 5,
        out_specs=vmem,
        cost_estimate=cost,
    )
    return fn(x, w_qkv_h, b_qkv_h, wo_h, bo_2)


# ---------------- pure JAX reference (mirrors the torch module) ----------------
def self_attention_ref(x, wq, bq, wk, bk, wv, bv, wo, bo, num_heads):
    B, S, E = x.shape
    hd = E // num_heads
    q = (x @ wq + bq).reshape(B, S, num_heads, hd).transpose(0, 2, 1, 3)
    k = (x @ wk + bk).reshape(B, S, num_heads, hd).transpose(0, 2, 1, 3)
    v = (x @ wv + bv).reshape(B, S, num_heads, hd).transpose(0, 2, 1, 3)
    scores = jnp.einsum('bhqd,bhkd->bhqk', q, k) / math.sqrt(hd)
    attn = jax.nn.softmax(scores, axis=-1)
    ctx = jnp.einsum('bhqk,bhkd->bhqd', attn, v)
    ctx = ctx.transpose(0, 2, 1, 3).reshape(B, S, E)
    return ctx @ wo + bo


if __name__ == "__main__":
    key = jax.random.PRNGKey(0)
    ks = jax.random.split(key, 9)
    B, S, E = BATCH, SEQ, EMBED_DIM
    se = 1.0 / math.sqrt(E)

    x = jax.random.normal(ks[0], (B, S, E), jnp.float32)
    wq = jax.random.normal(ks[1], (E, E), jnp.float32) * se
    wk = jax.random.normal(ks[2], (E, E), jnp.float32) * se
    wv = jax.random.normal(ks[3], (E, E), jnp.float32) * se
    wo = jax.random.normal(ks[4], (E, E), jnp.float32) * se
    bq = jax.random.normal(ks[5], (E,), jnp.float32) * 0.02
    bk = jax.random.normal(ks[6], (E,), jnp.float32) * 0.02
    bv = jax.random.normal(ks[7], (E,), jnp.float32) * 0.02
    bo = jax.random.normal(ks[8], (E,), jnp.float32) * 0.02

    out = self_attention_pallas(x, wq, bq, wk, bk, wv, bv, wo, bo)
    out = jax.block_until_ready(out)

    ref = jax.block_until_ready(
        self_attention_ref(x, wq, bq, wk, bk, wv, bv, wo, bo, NUM_HEADS))

    assert out.shape == (B, S, E)
    assert jnp.allclose(out, ref, rtol=1e-2, atol=1e-2), "mismatch vs JAX reference"
    print("KERNEL_OK")
</pallas_src>

<mosaic_0001>
module attributes {stable_mosaic.version = 11 : i64} {
  func.func @self_attention_kernel(%arg0: memref<2x8x32xf32, #tpu.memory_space<vmem>>, %arg1: memref<4x32x24xf32, #tpu.memory_space<vmem>>, %arg2: memref<4x1x24xf32, #tpu.memory_space<vmem>>, %arg3: memref<4x8x32xf32, #tpu.memory_space<vmem>>, %arg4: memref<1x32xf32, #tpu.memory_space<vmem>>, %arg5: memref<2x8x32xf32, #tpu.memory_space<vmem>>) attributes {dimension_semantics = [], scalar_prefetch = 0 : i64, scratch_operands = 0 : i64, tpu.core_type = #tpu.core_type<tc>} {
    %c0 = arith.constant 0 : index
    %c0_0 = arith.constant 0 : index
    %c0_1 = arith.constant 0 : index
    %0 = vector.load %arg0[%c0, %c0_0, %c0_1] : memref<2x8x32xf32, #tpu.memory_space<vmem>>, vector<2x8x32xf32>
    %1 = vector.shape_cast %0 : vector<2x8x32xf32> to vector<2x1x8x32xf32>
    %2 = vector.shape_cast %1 : vector<2x1x8x32xf32> to vector<2x1x8x32xf32>
    %3 = vector.broadcast %2 : vector<2x1x8x32xf32> to vector<2x4x8x32xf32>
    %4 = vector.shape_cast %3 : vector<2x4x8x32xf32> to vector<8x8x32xf32>
    %c0_2 = arith.constant 0 : index
    %c0_3 = arith.constant 0 : index
    %c0_4 = arith.constant 0 : index
    %5 = vector.load %arg1[%c0_2, %c0_3, %c0_4] : memref<4x32x24xf32, #tpu.memory_space<vmem>>, vector<4x32x24xf32>
    %6 = vector.shape_cast %5 : vector<4x32x24xf32> to vector<1x4x32x24xf32>
    %7 = vector.shape_cast %6 : vector<1x4x32x24xf32> to vector<1x4x32x24xf32>
    %8 = vector.broadcast %7 : vector<1x4x32x24xf32> to vector<2x4x32x24xf32>
    %9 = vector.shape_cast %8 : vector<2x4x32x24xf32> to vector<8x32x24xf32>
    %c0_5 = arith.constant 0 : index
    %c0_6 = arith.constant 0 : index
    %c0_7 = arith.constant 0 : index
    %10 = vector.load %arg2[%c0_5, %c0_6, %c0_7] : memref<4x1x24xf32, #tpu.memory_space<vmem>>, vector<4x1x24xf32>
    %11 = vector.shape_cast %10 : vector<4x1x24xf32> to vector<1x4x1x24xf32>
    %12 = vector.shape_cast %11 : vector<1x4x1x24xf32> to vector<1x4x1x24xf32>
    %13 = vector.broadcast %12 : vector<1x4x1x24xf32> to vector<2x4x1x24xf32>
    %14 = vector.shape_cast %13 : vector<2x4x1x24xf32> to vector<8x1x24xf32>
    %c0_8 = arith.constant 0 : index
    %c0_9 = arith.constant 0 : index
    %c0_10 = arith.constant 0 : index
    %15 = vector.load %arg3[%c0_8, %c0_9, %c0_10] : memref<4x8x32xf32, #tpu.memory_space<vmem>>, vector<4x8x32xf32>
    %16 = vector.shape_cast %15 : vector<4x8x32xf32> to vector<1x4x8x32xf32>
    %17 = vector.shape_cast %16 : vector<1x4x8x32xf32> to vector<1x4x8x32xf32>
    %18 = vector.broadcast %17 : vector<1x4x8x32xf32> to vector<2x4x8x32xf32>
    %19 = vector.shape_cast %18 : vector<2x4x8x32xf32> to vector<8x8x32xf32>
    "tpu.trace_start"() <{level = 10 : i32, message = "bse,bed->bsd"}> : () -> ()
    %cst = arith.constant dense<0.000000e+00> : vector<8x8x24xf32>
    %20 = tpu.matmul %4, %9, %cst {dimension_numbers = #tpu.dot_dimension_numbers<[2], [1], [1], [2], [0, 0, 0, 1, 1, 2], [0], [0]>} : vector<8x8x32xf32>, vector<8x32x24xf32>, vector<8x8x24xf32> -> vector<8x8x24xf32>
    "tpu.trace_stop"() : () -> ()
    %21 = vector.broadcast %14 : vector<8x1x24xf32> to vector<8x8x24xf32>
    %22 = arith.addf %20, %21 : vector<8x8x24xf32>
    %23 = vector.extract_strided_slice %22 {offsets = [0, 0, 0], sizes = [8, 8, 8], strides = [1, 1, 1]} : vector<8x8x24xf32> to vector<8x8x8xf32>
    %24 = vector.extract_strided_slice %22 {offsets = [0, 0, 8], sizes = [8, 8, 8], strides = [1, 1, 1]} : vector<8x8x24xf32> to vector<8x8x8xf32>
    %25 = vector.extract_strided_slice %22 {offsets = [0, 0, 16], sizes = [8, 8, 8], strides = [1, 1, 1]} : vector<8x8x24xf32> to vector<8x8x8xf32>
    "tpu.trace_start"() <{level = 10 : i32, message = "bqd,bkd->bqk"}> : () -> ()
    %cst_11 = arith.constant dense<0.000000e+00> : vector<8x8x8xf32>
    %26 = tpu.matmul %23, %24, %cst_11 {dimension_numbers = #tpu.dot_dimension_numbers<[2], [2], [1], [1], [0, 0, 0, 1, 1, 1], [0], [0]>} : vector<8x8x8xf32>, vector<8x8x8xf32>, vector<8x8x8xf32> -> vector<8x8x8xf32>
    "tpu.trace_stop"() : () -> ()
    %cst_12 = arith.constant dense<0xFF800000> : vector<8x8xf32>
    %27 = vector.multi_reduction <maximumf>, %26, %cst_12 [2] : vector<8x8x8xf32> to vector<8x8xf32>
    %28 = vector.shape_cast %27 : vector<8x8xf32> to vector<8x8x1xf32>
    %29 = vector.broadcast %28 : vector<8x8x1xf32> to vector<8x8x8xf32>
    %30 = arith.subf %26, %29 : vector<8x8x8xf32>
    %31 = math.exp %30 : vector<8x8x8xf32>
    %cst_13 = arith.constant dense<0.000000e+00> : vector<8x8xf32>
    %32 = vector.multi_reduction <add>, %31, %cst_13 [2] : vector<8x8x8xf32> to vector<8x8xf32>
    %33 = vector.shape_cast %32 : vector<8x8xf32> to vector<8x8x1xf32>
    %34 = tpu.reciprocal %33 {approx = true} : vector<8x8x1xf32> -> vector<8x8x1xf32>
    %35 = vector.broadcast %34 : vector<8x8x1xf32> to vector<8x8x8xf32>
    %36 = arith.mulf %31, %35 : vector<8x8x8xf32>
    "tpu.trace_start"() <{level = 10 : i32, message = "bqk,bkd->bqd"}> : () -> ()
    %cst_14 = arith.constant dense<0.000000e+00> : vector<8x8x8xf32>
    %37 = tpu.matmul %36, %25, %cst_14 {dimension_numbers = #tpu.dot_dimension_numbers<[2], [1], [1], [2], [0, 0, 0, 1, 1, 2], [0], [0]>} : vector<8x8x8xf32>, vector<8x8x8xf32>, vector<8x8x8xf32> -> vector<8x8x8xf32>
    "tpu.trace_stop"() : () -> ()
    "tpu.trace_start"() <{level = 10 : i32, message = "bsd,bde->bse"}> : () -> ()
    %cst_15 = arith.constant dense<0.000000e+00> : vector<8x8x32xf32>
    %38 = tpu.matmul %37, %19, %cst_15 {dimension_numbers = #tpu.dot_dimension_numbers<[2], [1], [1], [2], [0, 0, 0, 1, 1, 2], [0], [0]>} : vector<8x8x8xf32>, vector<8x8x32xf32>, vector<8x8x32xf32> -> vector<8x8x32xf32>
    "tpu.trace_stop"() : () -> ()
    %c0_16 = arith.constant 0 : index
    %c0_17 = arith.constant 0 : index
    %39 = vector.load %arg4[%c0_16, %c0_17] : memref<1x32xf32, #tpu.memory_space<vmem>>, vector<1x32xf32>
    %40 = vector.shape_cast %38 : vector<8x8x32xf32> to vector<2x4x8x32xf32>
    %cst_18 = arith.constant dense<0.000000e+00> : vector<2x8x32xf32>
    %41 = vector.multi_reduction <add>, %40, %cst_18 [1] : vector<2x4x8x32xf32> to vector<2x8x32xf32>
    %42 = vector.shape_cast %39 : vector<1x32xf32> to vector<1x1x32xf32>
    %43 = vector.broadcast %42 : vector<1x1x32xf32> to vector<2x8x32xf32>
    %44 = arith.addf %41, %43 : vector<2x8x32xf32>
    %c0_19 = arith.constant 0 : index
    %c0_20 = arith.constant 0 : index
    %c0_21 = arith.constant 0 : index
    %45 = vector.load %arg5[%c0_19, %c0_20, %c0_21] : memref<2x8x32xf32, #tpu.memory_space<vmem>>, vector<2x8x32xf32>
    tpu.vector_store %arg5[%c0_19, %c0_20, %c0_21], %44 {strides = array<i32>} : memref<2x8x32xf32, #tpu.memory_space<vmem>>, vector<2x8x32xf32>,
    return
  }
}

</mosaic_0001>

<llo_original>
// kernel: tpu_custom_call.1
$region0: #{tpu_custom_call.1}
  #allocation0 [shape = 'u32[]', space=smem, size = 0x4, offset = 0x4, fixed_abs, tag = 'smem constant byte address 0x4 - core index']
  #allocation1 [shape = 'u32[72,128]{1,0:T(1,128)}', space=vmem, size = 0x9000, scoped, tag = 'internal scratch']
  %s0 = inlined_call_operand.vmem [shape: f32[2,8,32], index: 0, kind: input, shape index: {}]
  %s1 = inlined_call_operand.vmem [shape: f32[4,32,24], index: 1, kind: input, shape index: {}]
  %s2 = inlined_call_operand.vmem [shape: f32[4,1,24], index: 2, kind: input, shape index: {}]
  %s3 = inlined_call_operand.vmem [shape: f32[4,8,32], index: 3, kind: input, shape index: {}]
  %s4 = inlined_call_operand.vmem [shape: f32[1,32], index: 4, kind: input, shape index: {}]
  %s5 = inlined_call_operand.hbm [shape: f32[2,8,32], index: 5, kind: output, shape index: {}]
  %s6 = sld [smem:[#allocation0]]
  $region30: #{tpu_custom_call.1} parent=0
    _
  %s8 = ssub.s32 1, %s6
  %s9 = scalar_select 0, %s8, %s6
  $region1: #{tpu_custom_call.1} parent=0
    #allocation2 [shape = 'u8[8192]{0}', space=vmem, size = 0x2000, scoped, tag = 'output window, operand 0, single buffered']
    #allocation3 [shape = 's32[1]{0}', space=sflag, size = 0x4, scoped, tag = 'scoped memory for tpu_custom_call.1']
    %10 = vsyncpa [#allocation3], 0
    // Predicated region
    $region2: #{tpu_custom_call.1} parent=1 // pred_check
      _
    $region3: #{tpu_custom_call.1} parent=1 // pred_check_branch
      %12 = sbr.rel (0) target = $region5
    $region4: #{tpu_custom_call.1} parent=1 // pred_region
      _
    $region5: #{tpu_custom_call.1} parent=1 // pred_fallthru
      _
    // Predicated region
    $region6: #{tpu_custom_call.1} parent=1 // pred_check
      _
    $region7: #{tpu_custom_call.1} parent=1 // pred_check_branch
      %14 = sbr.rel (0) target = $region9
    $region8: #{tpu_custom_call.1} parent=1 // pred_region
      _
    $region9: #{tpu_custom_call.1} parent=1 // pred_fallthru
      _
    // Predicated region
    $region10: #{tpu_custom_call.1} parent=1 // pred_check
      _
    $region11: #{tpu_custom_call.1} parent=1 // pred_check_branch
      %16 = sbr.rel (0) target = $region13
    $region12: #{tpu_custom_call.1} parent=1 // pred_region
      _
    $region13: #{tpu_custom_call.1} parent=1 // pred_fallthru
      _
    // Predicated region
    $region14: #{tpu_custom_call.1} parent=1 // pred_check
      _
    $region15: #{tpu_custom_call.1} parent=1 // pred_check_branch
      %18 = sbr.rel (0) target = $region17
    $region16: #{tpu_custom_call.1} parent=1 // pred_region
      _
    $region17: #{tpu_custom_call.1} parent=1 // pred_fallthru
      _
    // Predicated region
    $region18: #{tpu_custom_call.1} parent=1 // pred_check
      _
    $region19: #{tpu_custom_call.1} parent=1 // pred_check_branch
      %20 = sbr.rel (0) target = $region21
    $region20: #{tpu_custom_call.1} parent=1 // pred_region
      _
    $region21: #{tpu_custom_call.1} parent=1 // pred_fallthru
      _
    %v21 = vld [vmem:[%s0] sm:$0xff]
    %v22 = vld [vmem:[%s0 + $0x8] sm:$0xff]
    %v23 = vld [vmem:[%s1] sm:$0xff]
    %v24 = vld [vmem:[%s1 + $0x8] sm:$0xff]
    %v25 = vld [vmem:[%s1 + $0x10] sm:$0xff]
    %v26 = vld [vmem:[%s1 + $0x18] sm:$0xff]
    %v27 = vld [vmem:[%s1 + $0x20] sm:$0xff]
    %v28 = vld [vmem:[%s1 + $0x28] sm:$0xff]
    %v29 = vld [vmem:[%s1 + $0x30] sm:$0xff]
    %v30 = vld [vmem:[%s1 + $0x38] sm:$0xff]
    %v31 = vld [vmem:[%s1 + $0x40] sm:$0xff]
    %v32 = vld [vmem:[%s1 + $0x48] sm:$0xff]
    %v33 = vld [vmem:[%s1 + $0x50] sm:$0xff]
    %v34 = vld [vmem:[%s1 + $0x58] sm:$0xff]
    %v35 = vld [vmem:[%s1 + $0x60] sm:$0xff]
    %v36 = vld [vmem:[%s1 + $0x68] sm:$0xff]
    %v37 = vld [vmem:[%s1 + $0x70] sm:$0xff]
    %v38 = vld [vmem:[%s1 + $0x78] sm:$0xff]
    %v39 = vld [vmem:[%s2] sm:$0x1]
    %v40 = vld [vmem:[%s2 + $0x1] sm:$0x1]
    %v41 = vld [vmem:[%s2 + $0x2] sm:$0x1]
    %v42 = vld [vmem:[%s2 + $0x3] sm:$0x1]
    %v43 = vld [vmem:[%s3] sm:$0xff]
    %v44 = vld [vmem:[%s3 + $0x8] sm:$0xff]
    %v45 = vld [vmem:[%s3 + $0x10] sm:$0xff]
    %v46 = vld [vmem:[%s3 + $0x18] sm:$0xff]
    %v51 = vperm.slane %v39, 0
    %v52 = vperm.slane %v40, 0
    %v53 = vperm.slane %v41, 0
    %v54 = vperm.slane %v42, 0
    %vm59 = vcmask 261120
    %v61 = vsel %vm59, %v21, 0
    %63 = vmatpush.msra.mxu0 0.0
    %64 = vmatpush.msra.mxu0 0.0
    %65 = vmatpush.msra.mxu0 0.0
    %66 = vmatpush.msra.mxu0 0.0
    %67 = vmatpush.msra.mxu0 0.0
    %68 = vmatpush.msra.mxu0 0.0
    %69 = vmatpush.msra.mxu0 0.0
    %70 = vmatpush.msra.mxu0 0.0
    %71 = vmatpush.msra.mxu0 0.0
    %72 = vmatpush.msra.mxu0 0.0
    %73 = vmatpush.msra.mxu0 0.0
    %74 = vmatpush.msra.mxu0 0.0
    %75 = vmatpush.msra.mxu0 %v26
    %76 = vmatpush.msra.mxu0 %v25
    %77 = vmatpush.msra.mxu0 %v24
    %78 = vmatpush.msra.mxu0 %v23
    %79 = vmatmul.f32.gmra.mxu0 %v61
    %v80 = vpop.f32.mrf.mxu0
    %v81 = vadd.f32 %v51, %v80
    %82 = vdwg.mxu0
    %83 = vmatpush.msra.mxu0 0.0
    %84 = vmatpush.msra.mxu0 0.0
    %85 = vmatpush.msra.mxu0 0.0
    %86 = vmatpush.msra.mxu0 0.0
    %87 = vmatpush.msra.mxu0 0.0
    %88 = vmatpush.msra.mxu0 0.0
    %89 = vmatpush.msra.mxu0 0.0
    %90 = vmatpush.msra.mxu0 0.0
    %91 = vmatpush.msra.mxu0 0.0
    %92 = vmatpush.msra.mxu0 0.0
    %93 = vmatpush.msra.mxu0 0.0
    %94 = vmatpush.msra.mxu0 0.0
    %95 = vmatpush.msra.mxu0 %v30
    %96 = vmatpush.msra.mxu0 %v29
    %97 = vmatpush.msra.mxu0 %v28
    %98 = vmatpush.msra.mxu0 %v27
    %99 = vmatmul.f32.gmra.mxu0 %v61
    %v100 = vpop.f32.mrf.mxu0
    %v101 = vadd.f32 %v52, %v100
    %102 = vdwg.mxu0
    %103 = vmatpush.msra.mxu0 0.0
    %104 = vmatpush.msra.mxu0 0.0
    %105 = vmatpush.msra.mxu0 0.0
    %106 = vmatpush.msra.mxu0 0.0
    %107 = vmatpush.msra.mxu0 0.0
    %108 = vmatpush.msra.mxu0 0.0
    %109 = vmatpush.msra.mxu0 0.0
    %110 = vmatpush.msra.mxu0 0.0
    %111 = vmatpush.msra.mxu0 0.0
    %112 = vmatpush.msra.mxu0 0.0
    %113 = vmatpush.msra.mxu0 0.0
    %114 = vmatpush.msra.mxu0 0.0
    %115 = vmatpush.msra.mxu0 %v34
    %116 = vmatpush.msra.mxu0 %v33
    %117 = vmatpush.msra.mxu0 %v32
    %118 = vmatpush.msra.mxu0 %v31
    %119 = vmatmul.f32.gmra.mxu0 %v61
    %v120 = vpop.f32.mrf.mxu0
    %v121 = vadd.f32 %v53, %v120
    %122 = vdwg.mxu0
    %123 = vmatpush.msra.mxu0 0.0
    %124 = vmatpush.msra.mxu0 0.0
    %125 = vmatpush.msra.mxu0 0.0
    %126 = vmatpush.msra.mxu0 0.0
    %127 = vmatpush.msra.mxu0 0.0
    %128 = vmatpush.msra.mxu0 0.0
    %129 = vmatpush.msra.mxu0 0.0
    %130 = vmatpush.msra.mxu0 0.0
    %131 = vmatpush.msra.mxu0 0.0
    %132 = vmatpush.msra.mxu0 0.0
    %133 = vmatpush.msra.mxu0 0.0
    %134 = vmatpush.msra.mxu0 0.0
    %135 = vmatpush.msra.mxu0 %v38
    %136 = vmatpush.msra.mxu0 %v37
    %137 = vmatpush.msra.mxu0 %v36
    %138 = vmatpush.msra.mxu0 %v35
    %139 = vmatmul.f32.gmra.mxu0 %v61
    %v140 = vpop.f32.mrf.mxu0
    %v141 = vadd.f32 %v54, %v140
    %142 = vdwg.mxu0
    %v144 = vsel %vm59, %v22, 0
    %146 = vmatpush.msra.mxu0 0.0
    %147 = vmatpush.msra.mxu0 0.0
    %148 = vmatpush.msra.mxu0 0.0
    %149 = vmatpush.msra.mxu0 0.0
    %150 = vmatpush.msra.mxu0 0.0
    %151 = vmatpush.msra.mxu0 0.0
    %152 = vmatpush.msra.mxu0 0.0
    %153 = vmatpush.msra.mxu0 0.0
    %154 = vmatpush.msra.mxu0 0.0
    %155 = vmatpush.msra.mxu0 0.0
    %156 = vmatpush.msra.mxu0 0.0
    %157 = vmatpush.msra.mxu0 0.0
    %158 = vmatpush.msra.mxu0 %v26
    %159 = vmatpush.msra.mxu0 %v25
    %160 = vmatpush.msra.mxu0 %v24
    %161 = vmatpush.msra.mxu0 %v23
    %162 = vmatmul.f32.gmra.mxu0 %v144
    %v163 = vpop.f32.mrf.mxu0
    %v164 = vadd.f32 %v51, %v163
    %165 = vdwg.mxu0
    %166 = vmatpush.msra.mxu0 0.0
    %167 = vmatpush.msra.mxu0 0.0
    %168 = vmatpush.msra.mxu0 0.0
    %169 = vmatpush.msra.mxu0 0.0
    %170 = vmatpush.msra.mxu0 0.0
    %171 = vmatpush.msra.mxu0 0.0
    %172 = vmatpush.msra.mxu0 0.0
    %173 = vmatpush.msra.mxu0 0.0
    %174 = vmatpush.msra.mxu0 0.0
    %175 = vmatpush.msra.mxu0 0.0
    %176 = vmatpush.msra.mxu0 0.0
    %177 = vmatpush.msra.mxu0 0.0
    %178 = vmatpush.msra.mxu0 %v30
    %179 = vmatpush.msra.mxu0 %v29
    %180 = vmatpush.msra.mxu0 %v28
    %181 = vmatpush.msra.mxu0 %v27
    %182 = vmatmul.f32.gmra.mxu0 %v144
    %v183 = vpop.f32.mrf.mxu0
    %v184 = vadd.f32 %v52, %v183
    %185 = vdwg.mxu0
    %186 = vmatpush.msra.mxu0 0.0
    %187 = vmatpush.msra.mxu0 0.0
    %188 = vmatpush.msra.mxu0 0.0
    %189 = vmatpush.msra.mxu0 0.0
    %190 = vmatpush.msra.mxu0 0.0
    %191 = vmatpush.msra.mxu0 0.0
    %192 = vmatpush.msra.mxu0 0.0
    %193 = vmatpush.msra.mxu0 0.0
    %194 = vmatpush.msra.mxu0 0.0
    %195 = vmatpush.msra.mxu0 0.0
    %196 = vmatpush.msra.mxu0 0.0
    %197 = vmatpush.msra.mxu0 0.0
    %198 = vmatpush.msra.mxu0 %v34
    %199 = vmatpush.msra.mxu0 %v33
    %200 = vmatpush.msra.mxu0 %v32
    %201 = vmatpush.msra.mxu0 %v31
    %202 = vmatmul.f32.gmra.mxu0 %v144
    %v203 = vpop.f32.mrf.mxu0
    %v204 = vadd.f32 %v53, %v203
    %205 = vdwg.mxu0
    %206 = vmatpush.msra.mxu0 0.0
    %207 = vmatpush.msra.mxu0 0.0
    %208 = vmatpush.msra.mxu0 0.0
    %209 = vmatpush.msra.mxu0 0.0
    %210 = vmatpush.msra.mxu0 0.0
    %211 = vmatpush.msra.mxu0 0.0
    %212 = vmatpush.msra.mxu0 0.0
    %213 = vmatpush.msra.mxu0 0.0
    %214 = vmatpush.msra.mxu0 0.0
    %215 = vmatpush.msra.mxu0 0.0
    %216 = vmatpush.msra.mxu0 0.0
    %217 = vmatpush.msra.mxu0 0.0
    %218 = vmatpush.msra.mxu0 %v38
    %219 = vmatpush.msra.mxu0 %v37
    %220 = vmatpush.msra.mxu0 %v36
    %221 = vmatpush.msra.mxu0 %v35
    %222 = vmatmul.f32.gmra.mxu0 %v144
    %v223 = vpop.f32.mrf.mxu0
    %v224 = vadd.f32 %v54, %v223
    %225 = vdwg.mxu0
    %227 = vrot.lane.b32.xlu0 %v81, 120
    %v228 = vpop.permute.xlu0 %227
    %vm229 = vcmask 64512
    %v230 = vsel %vm229, %v81, 0
    %v232 = vsel %vm229, %v228, 0
    %234 = vmatpush.xpose.msra.mxu0 0.0
    %235 = vmatpush.xpose.msra.mxu0 0.0
    %236 = vmatpush.xpose.msra.mxu0 0.0
    %237 = vmatpush.xpose.msra.mxu0 0.0
    %238 = vmatpush.xpose.msra.mxu0 0.0
    %239 = vmatpush.xpose.msra.mxu0 0.0
    %240 = vmatpush.xpose.msra.mxu0 0.0
    %241 = vmatpush.xpose.msra.mxu0 0.0
    %242 = vmatpush.xpose.msra.mxu0 0.0
    %243 = vmatpush.xpose.msra.mxu0 0.0
    %244 = vmatpush.xpose.msra.mxu0 0.0
    %245 = vmatpush.xpose.msra.mxu0 0.0
    %246 = vmatpush.xpose.msra.mxu0 0.0
    %247 = vmatpush.xpose.msra.mxu0 0.0
    %248 = vmatpush.xpose.msra.mxu0 0.0
    %249 = vmatpush.xpose.msra.mxu0 %v232
    %250 = vmatmul.f32.gmra.mxu0 %v230
    %v251 = vpop.f32.mrf.mxu0
    %v252 = vadd.f32 0.0, %v251
    %253 = vdwg.mxu0
    %255 = vrot.lane.b32.xlu0 %v101, 120
    %v256 = vpop.permute.xlu0 %255
    %v257 = vsel %vm229, %v101, 0
    %v259 = vsel %vm229, %v256, 0
    %261 = vmatpush.xpose.msra.mxu0 0.0
    %262 = vmatpush.xpose.msra.mxu0 0.0
    %263 = vmatpush.xpose.msra.mxu0 0.0
    %264 = vmatpush.xpose.msra.mxu0 0.0
    %265 = vmatpush.xpose.msra.mxu0 0.0
    %266 = vmatpush.xpose.msra.mxu0 0.0
    %267 = vmatpush.xpose.msra.mxu0 0.0
    %268 = vmatpush.xpose.msra.mxu0 0.0
    %269 = vmatpush.xpose.msra.mxu0 0.0
    %270 = vmatpush.xpose.msra.mxu0 0.0
    %271 = vmatpush.xpose.msra.mxu0 0.0
    %272 = vmatpush.xpose.msra.mxu0 0.0
    %273 = vmatpush.xpose.msra.mxu0 0.0
    %274 = vmatpush.xpose.msra.mxu0 0.0
    %275 = vmatpush.xpose.msra.mxu0 0.0
    %276 = vmatpush.xpose.msra.mxu0 %v259
    %277 = vmatmul.f32.gmra.mxu0 %v257
    %v278 = vpop.f32.mrf.mxu0
    %v279 = vadd.f32 0.0, %v278
    %280 = vdwg.mxu0
    %282 = vrot.lane.b32.xlu0 %v121, 120
    %v283 = vpop.permute.xlu0 %282
    %v284 = vsel %vm229, %v121, 0
    %v286 = vsel %vm229, %v283, 0
    %288 = vmatpush.xpose.msra.mxu0 0.0
    %289 = vmatpush.xpose.msra.mxu0 0.0
    %290 = vmatpush.xpose.msra.mxu0 0.0
    %291 = vmatpush.xpose.msra.mxu0 0.0
    %292 = vmatpush.xpose.msra.mxu0 0.0
    %293 = vmatpush.xpose.msra.mxu0 0.0
    %294 = vmatpush.xpose.msra.mxu0 0.0
    %295 = vmatpush.xpose.msra.mxu0 0.0
    %296 = vmatpush.xpose.msra.mxu0 0.0
    %297 = vmatpush.xpose.msra.mxu0 0.0
    %298 = vmatpush.xpose.msra.mxu0 0.0
    %299 = vmatpush.xpose.msra.mxu0 0.0
    %300 = vmatpush.xpose.msra.mxu0 0.0
    %301 = vmatpush.xpose.msra.mxu0 0.0
    %302 = vmatpush.xpose.msra.mxu0 0.0
    %303 = vmatpush.xpose.msra.mxu0 %v286
    %304 = vmatmul.f32.gmra.mxu0 %v284
    %v305 = vpop.f32.mrf.mxu0
    %v306 = vadd.f32 0.0, %v305
    %307 = vdwg.mxu0
    %309 = vrot.lane.b32.xlu0 %v141, 120
    %v310 = vpop.permute.xlu0 %309
    %v311 = vsel %vm229, %v141, 0
    %v313 = vsel %vm229, %v310, 0
    %315 = vmatpush.xpose.msra.mxu0 0.0
    %316 = vmatpush.xpose.msra.mxu0 0.0
    %317 = vmatpush.xpose.msra.mxu0 0.0
    %318 = vmatpush.xpose.msra.mxu0 0.0
    %319 = vmatpush.xpose.msra.mxu0 0.0
    %320 = vmatpush.xpose.msra.mxu0 0.0
    %321 = vmatpush.xpose.msra.mxu0 0.0
    %322 = vmatpush.xpose.msra.mxu0 0.0
    %323 = vmatpush.xpose.msra.mxu0 0.0
    %324 = vmatpush.xpose.msra.mxu0 0.0
    %325 = vmatpush.xpose.msra.mxu0 0.0
    %326 = vmatpush.xpose.msra.mxu0 0.0
    %327 = vmatpush.xpose.msra.mxu0 0.0
    %328 = vmatpush.xpose.msra.mxu0 0.0
    %329 = vmatpush.xpose.msra.mxu0 0.0
    %330 = vmatpush.xpose.msra.mxu0 %v313
    %331 = vmatmul.f32.gmra.mxu0 %v311
    %v332 = vpop.f32.mrf.mxu0
    %v333 = vadd.f32 0.0, %v332
    %334 = vdwg.mxu0
    %336 = vrot.lane.b32.xlu0 %v164, 120
    %v337 = vpop.permute.xlu0 %336
    %v338 = vsel %vm229, %v164, 0
    %v340 = vsel %vm229, %v337, 0
    %342 = vmatpush.xpose.msra.mxu0 0.0
    %343 = vmatpush.xpose.msra.mxu0 0.0
    %344 = vmatpush.xpose.msra.mxu0 0.0
    %345 = vmatpush.xpose.msra.mxu0 0.0
    %346 = vmatpush.xpose.msra.mxu0 0.0
    %347 = vmatpush.xpose.msra.mxu0 0.0
    %348 = vmatpush.xpose.msra.mxu0 0.0
    %349 = vmatpush.xpose.msra.mxu0 0.0
    %350 = vmatpush.xpose.msra.mxu0 0.0
    %351 = vmatpush.xpose.msra.mxu0 0.0
    %352 = vmatpush.xpose.msra.mxu0 0.0
    %353 = vmatpush.xpose.msra.mxu0 0.0
    %354 = vmatpush.xpose.msra.mxu0 0.0
    %355 = vmatpush.xpose.msra.mxu0 0.0
    %356 = vmatpush.xpose.msra.mxu0 0.0
    %357 = vmatpush.xpose.msra.mxu0 %v340
    %358 = vmatmul.f32.gmra.mxu0 %v338
    %v359 = vpop.f32.mrf.mxu0
    %v360 = vadd.f32 0.0, %v359
    %361 = vdwg.mxu0
    %363 = vrot.lane.b32.xlu0 %v184, 120
    %v364 = vpop.permute.xlu0 %363
    %v365 = vsel %vm229, %v184, 0
    %v367 = vsel %vm229, %v364, 0
    %369 = vmatpush.xpose.msra.mxu0 0.0
    %370 = vmatpush.xpose.msra.mxu0 0.0
    %371 = vmatpush.xpose.msra.mxu0 0.0
    %372 = vmatpush.xpose.msra.mxu0 0.0
    %373 = vmatpush.xpose.msra.mxu0 0.0
    %374 = vmatpush.xpose.msra.mxu0 0.0
    %375 = vmatpush.xpose.msra.mxu0 0.0
    %376 = vmatpush.xpose.msra.mxu0 0.0
    %377 = vmatpush.xpose.msra.mxu0 0.0
    %378 = vmatpush.xpose.msra.mxu0 0.0
    %379 = vmatpush.xpose.msra.mxu0 0.0
    %380 = vmatpush.xpose.msra.mxu0 0.0
    %381 = vmatpush.xpose.msra.mxu0 0.0
    %382 = vmatpush.xpose.msra.mxu0 0.0
    %383 = vmatpush.xpose.msra.mxu0 0.0
    %384 = vmatpush.xpose.msra.mxu0 %v367
    %385 = vmatmul.f32.gmra.mxu0 %v365
    %v386 = vpop.f32.mrf.mxu0
    %v387 = vadd.f32 0.0, %v386
    %388 = vdwg.mxu0
    %390 = vrot.lane.b32.xlu0 %v204, 120
    %v391 = vpop.permute.xlu0 %390
    %v392 = vsel %vm229, %v204, 0
    %v394 = vsel %vm229, %v391, 0
    %396 = vmatpush.xpose.msra.mxu0 0.0
    %397 = vmatpush.xpose.msra.mxu0 0.0
    %398 = vmatpush.xpose.msra.mxu0 0.0
    %399 = vmatpush.xpose.msra.mxu0 0.0
    %400 = vmatpush.xpose.msra.mxu0 0.0
    %401 = vmatpush.xpose.msra.mxu0 0.0
    %402 = vmatpush.xpose.msra.mxu0 0.0
    %403 = vmatpush.xpose.msra.mxu0 0.0
    %404 = vmatpush.xpose.msra.mxu0 0.0
    %405 = vmatpush.xpose.msra.mxu0 0.0
    %406 = vmatpush.xpose.msra.mxu0 0.0
    %407 = vmatpush.xpose.msra.mxu0 0.0
    %408 = vmatpush.xpose.msra.mxu0 0.0
    %409 = vmatpush.xpose.msra.mxu0 0.0
    %410 = vmatpush.xpose.msra.mxu0 0.0
    %411 = vmatpush.xpose.msra.mxu0 %v394
    %412 = vmatmul.f32.gmra.mxu0 %v392
    %v413 = vpop.f32.mrf.mxu0
    %v414 = vadd.f32 0.0, %v413
    %415 = vdwg.mxu0
    %417 = vrot.lane.b32.xlu0 %v224, 120
    %v418 = vpop.permute.xlu0 %417
    %v419 = vsel %vm229, %v224, 0
    %v421 = vsel %vm229, %v418, 0
    %423 = vmatpush.xpose.msra.mxu0 0.0
    %424 = vmatpush.xpose.msra.mxu0 0.0
    %425 = vmatpush.xpose.msra.mxu0 0.0
    %426 = vmatpush.xpose.msra.mxu0 0.0
    %427 = vmatpush.xpose.msra.mxu0 0.0
    %428 = vmatpush.xpose.msra.mxu0 0.0
    %429 = vmatpush.xpose.msra.mxu0 0.0
    %430 = vmatpush.xpose.msra.mxu0 0.0
    %431 = vmatpush.xpose.msra.mxu0 0.0
    %432 = vmatpush.xpose.msra.mxu0 0.0
    %433 = vmatpush.xpose.msra.mxu0 0.0
    %434 = vmatpush.xpose.msra.mxu0 0.0
    %435 = vmatpush.xpose.msra.mxu0 0.0
    %436 = vmatpush.xpose.msra.mxu0 0.0
    %437 = vmatpush.xpose.msra.mxu0 0.0
    %438 = vmatpush.xpose.msra.mxu0 %v421
    %439 = vmatmul.f32.gmra.mxu0 %v419
    %v440 = vpop.f32.mrf.mxu0
    %v441 = vadd.f32 0.0, %v440
    %442 = vdwg.mxu0
    %v443 = vsel %vm229, %v252, -inf
    %444 = vmax.xlane.f32.xlu0 %v443
    %v445 = vpop.xlane.xlu0 %444
    %v446 = vsel %vm229, %v279, -inf
    %447 = vmax.xlane.f32.xlu0 %v446
    %v448 = vpop.xlane.xlu0 %447
    %v449 = vsel %vm229, %v306, -inf
    %450 = vmax.xlane.f32.xlu0 %v449
    %v451 = vpop.xlane.xlu0 %450
    %v452 = vsel %vm229, %v333, -inf
    %453 = vmax.xlane.f32.xlu0 %v452
    %v454 = vpop.xlane.xlu0 %453
    %v455 = vsel %vm229, %v360, -inf
    %456 = vmax.xlane.f32.xlu0 %v455
    %v457 = vpop.xlane.xlu0 %456
    %v458 = vsel %vm229, %v387, -inf
    %459 = vmax.xlane.f32.xlu0 %v458
    %v460 = vpop.xlane.xlu0 %459
    %v461 = vsel %vm229, %v414, -inf
    %462 = vmax.xlane.f32.xlu0 %v461
    %v463 = vpop.xlane.xlu0 %462
    %v464 = vsel %vm229, %v441, -inf
    %465 = vmax.xlane.f32.xlu0 %v464
    %v466 = vpop.xlane.xlu0 %465
    %v467 = vsub.f32 %v252, %v445
    %v468 = vsub.f32 %v279, %v448
    %v469 = vsub.f32 %v306, %v451
    %v470 = vsub.f32 %v333, %v454
    %v471 = vsub.f32 %v360, %v457
    %v472 = vsub.f32 %v387, %v460
    %v473 = vsub.f32 %v414, %v463
    %v474 = vsub.f32 %v441, %v466
    %v475 = vmul.f32 %v467, 1.442695
    %v476 = vpow.pop %v475
    %v477 = vmul.f32 %v468, 1.442695
    %v478 = vpow.pop %v477
    %v479 = vmul.f32 %v469, 1.442695
    %v480 = vpow.pop %v479
    %v481 = vmul.f32 %v470, 1.442695
    %v482 = vpow.pop %v481
    %v483 = vmul.f32 %v471, 1.442695
    %v484 = vpow.pop %v483
    %v485 = vmul.f32 %v472, 1.442695
    %v486 = vpow.pop %v485
    %v487 = vmul.f32 %v473, 1.442695
    %v488 = vpow.pop %v487
    %v489 = vmul.f32 %v474, 1.442695
    %v490 = vpow.pop %v489
    %v491 = vsel %vm229, %v476, 0.0
    %492 = vadd.xlane.f32.xlu0 %v491
    %v493 = vpop.xlane.xlu0 %492
    %v494 = vsel %vm229, %v478, 0.0
    %495 = vadd.xlane.f32.xlu0 %v494
    %v496 = vpop.xlane.xlu0 %495
    %v497 = vsel %vm229, %v480, 0.0
    %498 = vadd.xlane.f32.xlu0 %v497
    %v499 = vpop.xlane.xlu0 %498
    %v500 = vsel %vm229, %v482, 0.0
    %501 = vadd.xlane.f32.xlu0 %v500
    %v502 = vpop.xlane.xlu0 %501
    %v503 = vsel %vm229, %v484, 0.0
    %504 = vadd.xlane.f32.xlu0 %v503
    %v505 = vpop.xlane.xlu0 %504
    %v506 = vsel %vm229, %v486, 0.0
    %507 = vadd.xlane.f32.xlu0 %v506
    %v508 = vpop.xlane.xlu0 %507
    %v509 = vsel %vm229, %v488, 0.0
    %510 = vadd.xlane.f32.xlu0 %v509
    %v511 = vpop.xlane.xlu0 %510
    %v512 = vsel %vm229, %v490, 0.0
    %513 = vadd.xlane.f32.xlu0 %v512
    %v514 = vpop.xlane.xlu0 %513
    %v515 = vrcp.pop %v493
    %v516 = vrcp.pop %v496
    %v517 = vrcp.pop %v499
    %v518 = vrcp.pop %v502
    %v519 = vrcp.pop %v505
    %v520 = vrcp.pop %v508
    %v521 = vrcp.pop %v511
    %v522 = vrcp.pop %v514
    %v523 = vmul.f32 %v476, %v515
    %v524 = vmul.f32 %v478, %v516
    %v525 = vmul.f32 %v480, %v517
    %v526 = vmul.f32 %v482, %v518
    %v527 = vmul.f32 %v484, %v519
    %v528 = vmul.f32 %v486, %v520
    %v529 = vmul.f32 %v488, %v521
    %v530 = vmul.f32 %v490, %v522
    %531 = vrot.lane.b32.xlu0 %v81, 112
    %v532 = vpop.permute.xlu0 %531
    %v535 = vsel %vm229, %v523, 0
    %537 = vmatpush.msra.mxu0 0.0
    %538 = vmatpush.msra.mxu0 0.0
    %539 = vmatpush.msra.mxu0 0.0
    %540 = vmatpush.msra.mxu0 0.0
    %541 = vmatpush.msra.mxu0 0.0
    %542 = vmatpush.msra.mxu0 0.0
    %543 = vmatpush.msra.mxu0 0.0
    %544 = vmatpush.msra.mxu0 0.0
    %545 = vmatpush.msra.mxu0 0.0
    %546 = vmatpush.msra.mxu0 0.0
    %547 = vmatpush.msra.mxu0 0.0
    %548 = vmatpush.msra.mxu0 0.0
    %549 = vmatpush.msra.mxu0 0.0
    %550 = vmatpush.msra.mxu0 0.0
    %551 = vmatpush.msra.mxu0 0.0
    %552 = vmatpush.msra.mxu0 %v532
    %553 = vmatmul.f32.gmra.mxu0 %v535
    %v554 = vpop.f32.mrf.mxu0
    %v555 = vadd.f32 0.0, %v554
    %556 = vdwg.mxu0
    %557 = vrot.lane.b32.xlu0 %v101, 112
    %v558 = vpop.permute.xlu0 %557
    %v561 = vsel %vm229, %v524, 0
    %563 = vmatpush.msra.mxu0 0.0
    %564 = vmatpush.msra.mxu0 0.0
    %565 = vmatpush.msra.mxu0 0.0
    %566 = vmatpush.msra.mxu0 0.0
    %567 = vmatpush.msra.mxu0 0.0
    %568 = vmatpush.msra.mxu0 0.0
    %569 = vmatpush.msra.mxu0 0.0
    %570 = vmatpush.msra.mxu0 0.0
    %571 = vmatpush.msra.mxu0 0.0
    %572 = vmatpush.msra.mxu0 0.0
    %573 = vmatpush.msra.mxu0 0.0
    %574 = vmatpush.msra.mxu0 0.0
    %575 = vmatpush.msra.mxu0 0.0
    %576 = vmatpush.msra.mxu0 0.0
    %577 = vmatpush.msra.mxu0 0.0
    %578 = vmatpush.msra.mxu0 %v558
    %579 = vmatmul.f32.gmra.mxu0 %v561
    %v580 = vpop.f32.mrf.mxu0
    %v581 = vadd.f32 0.0, %v580
    %582 = vdwg.mxu0
    %583 = vrot.lane.b32.xlu0 %v121, 112
    %v584 = vpop.permute.xlu0 %583
    %v587 = vsel %vm229, %v525, 0
    %589 = vmatpush.msra.mxu0 0.0
    %590 = vmatpush.msra.mxu0 0.0
    %591 = vmatpush.msra.mxu0 0.0
    %592 = vmatpush.msra.mxu0 0.0
    %593 = vmatpush.msra.mxu0 0.0
    %594 = vmatpush.msra.mxu0 0.0
    %595 = vmatpush.msra.mxu0 0.0
    %596 = vmatpush.msra.mxu0 0.0
    %597 = vmatpush.msra.mxu0 0.0
    %598 = vmatpush.msra.mxu0 0.0
    %599 = vmatpush.msra.mxu0 0.0
    %600 = vmatpush.msra.mxu0 0.0
    %601 = vmatpush.msra.mxu0 0.0
    %602 = vmatpush.msra.mxu0 0.0
    %603 = vmatpush.msra.mxu0 0.0
    %604 = vmatpush.msra.mxu0 %v584
    %605 = vmatmul.f32.gmra.mxu0 %v587
    %v606 = vpop.f32.mrf.mxu0
    %v607 = vadd.f32 0.0, %v606
    %608 = vdwg.mxu0
    %609 = vrot.lane.b32.xlu0 %v141, 112
    %v610 = vpop.permute.xlu0 %609
    %v613 = vsel %vm229, %v526, 0
    %615 = vmatpush.msra.mxu0 0.0
    %616 = vmatpush.msra.mxu0 0.0
    %617 = vmatpush.msra.mxu0 0.0
    %618 = vmatpush.msra.mxu0 0.0
    %619 = vmatpush.msra.mxu0 0.0
    %620 = vmatpush.msra.mxu0 0.0
    %621 = vmatpush.msra.mxu0 0.0
    %622 = vmatpush.msra.mxu0 0.0
    %623 = vmatpush.msra.mxu0 0.0
    %624 = vmatpush.msra.mxu0 0.0
    %625 = vmatpush.msra.mxu0 0.0
    %626 = vmatpush.msra.mxu0 0.0
    %627 = vmatpush.msra.mxu0 0.0
    %628 = vmatpush.msra.mxu0 0.0
    %629 = vmatpush.msra.mxu0 0.0
    %630 = vmatpush.msra.mxu0 %v610
    %631 = vmatmul.f32.gmra.mxu0 %v613
    %v632 = vpop.f32.mrf.mxu0
    %v633 = vadd.f32 0.0, %v632
    %634 = vdwg.mxu0
    %635 = vrot.lane.b32.xlu0 %v164, 112
    %v636 = vpop.permute.xlu0 %635
    %v639 = vsel %vm229, %v527, 0
    %641 = vmatpush.msra.mxu0 0.0
    %642 = vmatpush.msra.mxu0 0.0
    %643 = vmatpush.msra.mxu0 0.0
    %644 = vmatpush.msra.mxu0 0.0
    %645 = vmatpush.msra.mxu0 0.0
    %646 = vmatpush.msra.mxu0 0.0
    %647 = vmatpush.msra.mxu0 0.0
    %648 = vmatpush.msra.mxu0 0.0
    %649 = vmatpush.msra.mxu0 0.0
    %650 = vmatpush.msra.mxu0 0.0
    %651 = vmatpush.msra.mxu0 0.0
    %652 = vmatpush.msra.mxu0 0.0
    %653 = vmatpush.msra.mxu0 0.0
    %654 = vmatpush.msra.mxu0 0.0
    %655 = vmatpush.msra.mxu0 0.0
    %656 = vmatpush.msra.mxu0 %v636
    %657 = vmatmul.f32.gmra.mxu0 %v639
    %v658 = vpop.f32.mrf.mxu0
    %v659 = vadd.f32 0.0, %v658
    %660 = vdwg.mxu0
    %661 = vrot.lane.b32.xlu0 %v184, 112
    %v662 = vpop.permute.xlu0 %661
    %v665 = vsel %vm229, %v528, 0
    %667 = vmatpush.msra.mxu0 0.0
    %668 = vmatpush.msra.mxu0 0.0
    %669 = vmatpush.msra.mxu0 0.0
    %670 = vmatpush.msra.mxu0 0.0
    %671 = vmatpush.msra.mxu0 0.0
    %672 = vmatpush.msra.mxu0 0.0
    %673 = vmatpush.msra.mxu0 0.0
    %674 = vmatpush.msra.mxu0 0.0
    %675 = vmatpush.msra.mxu0 0.0
    %676 = vmatpush.msra.mxu0 0.0
    %677 = vmatpush.msra.mxu0 0.0
    %678 = vmatpush.msra.mxu0 0.0
    %679 = vmatpush.msra.mxu0 0.0
    %680 = vmatpush.msra.mxu0 0.0
    %681 = vmatpush.msra.mxu0 0.0
    %682 = vmatpush.msra.mxu0 %v662
    %683 = vmatmul.f32.gmra.mxu0 %v665
    %v684 = vpop.f32.mrf.mxu0
    %v685 = vadd.f32 0.0, %v684
    %686 = vdwg.mxu0
    %687 = vrot.lane.b32.xlu0 %v204, 112
    %v688 = vpop.permute.xlu0 %687
    %v691 = vsel %vm229, %v529, 0
    %693 = vmatpush.msra.mxu0 0.0
    %694 = vmatpush.msra.mxu0 0.0
    %695 = vmatpush.msra.mxu0 0.0
    %696 = vmatpush.msra.mxu0 0.0
    %697 = vmatpush.msra.mxu0 0.0
    %698 = vmatpush.msra.mxu0 0.0
    %699 = vmatpush.msra.mxu0 0.0
    %700 = vmatpush.msra.mxu0 0.0
    %701 = vmatpush.msra.mxu0 0.0
    %702 = vmatpush.msra.mxu0 0.0
    %703 = vmatpush.msra.mxu0 0.0
    %704 = vmatpush.msra.mxu0 0.0
    %705 = vmatpush.msra.mxu0 0.0
    %706 = vmatpush.msra.mxu0 0.0
    %707 = vmatpush.msra.mxu0 0.0
    %708 = vmatpush.msra.mxu0 %v688
    %709 = vmatmul.f32.gmra.mxu0 %v691
    %v710 = vpop.f32.mrf.mxu0
    %v711 = vadd.f32 0.0, %v710
    %712 = vdwg.mxu0
    %713 = vrot.lane.b32.xlu0 %v224, 112
    %v714 = vpop.permute.xlu0 %713
    %v717 = vsel %vm229, %v530, 0
    %719 = vmatpush.msra.mxu0 0.0
    %720 = vmatpush.msra.mxu0 0.0
    %721 = vmatpush.msra.mxu0 0.0
    %722 = vmatpush.msra.mxu0 0.0
    %723 = vmatpush.msra.mxu0 0.0
    %724 = vmatpush.msra.mxu0 0.0
    %725 = vmatpush.msra.mxu0 0.0
    %726 = vmatpush.msra.mxu0 0.0
    %727 = vmatpush.msra.mxu0 0.0
    %728 = vmatpush.msra.mxu0 0.0
    %729 = vmatpush.msra.mxu0 0.0
    %730 = vmatpush.msra.mxu0 0.0
    %731 = vmatpush.msra.mxu0 0.0
    %732 = vmatpush.msra.mxu0 0.0
    %733 = vmatpush.msra.mxu0 0.0
    %734 = vmatpush.msra.mxu0 %v714
    %735 = vmatmul.f32.gmra.mxu0 %v717
    %v736 = vpop.f32.mrf.mxu0
    %v737 = vadd.f32 0.0, %v736
    %738 = vdwg.mxu0
    %v740 = vsel %vm229, %v555, 0
    %742 = vmatpush.msra.mxu0 0.0
    %743 = vmatpush.msra.mxu0 0.0
    %744 = vmatpush.msra.mxu0 0.0
    %745 = vmatpush.msra.mxu0 0.0
    %746 = vmatpush.msra.mxu0 0.0
    %747 = vmatpush.msra.mxu0 0.0
    %748 = vmatpush.msra.mxu0 0.0
    %749 = vmatpush.msra.mxu0 0.0
    %750 = vmatpush.msra.mxu0 0.0
    %751 = vmatpush.msra.mxu0 0.0
    %752 = vmatpush.msra.mxu0 0.0
    %753 = vmatpush.msra.mxu0 0.0
    %754 = vmatpush.msra.mxu0 0.0
    %755 = vmatpush.msra.mxu0 0.0
    %756 = vmatpush.msra.mxu0 0.0
    %757 = vmatpush.msra.mxu0 %v43
    %758 = vmatmul.f32.gmra.mxu0 %v740
    %v759 = vpop.f32.mrf.mxu0
    %v760 = vadd.f32 0.0, %v759
    %761 = vdwg.mxu0
    %v763 = vsel %vm229, %v581, 0
    %765 = vmatpush.msra.mxu0 0.0
    %766 = vmatpush.msra.mxu0 0.0
    %767 = vmatpush.msra.mxu0 0.0
    %768 = vmatpush.msra.mxu0 0.0
    %769 = vmatpush.msra.mxu0 0.0
    %770 = vmatpush.msra.mxu0 0.0
    %771 = vmatpush.msra.mxu0 0.0
    %772 = vmatpush.msra.mxu0 0.0
    %773 = vmatpush.msra.mxu0 0.0
    %774 = vmatpush.msra.mxu0 0.0
    %775 = vmatpush.msra.mxu0 0.0
    %776 = vmatpush.msra.mxu0 0.0
    %777 = vmatpush.msra.mxu0 0.0
    %778 = vmatpush.msra.mxu0 0.0
    %779 = vmatpush.msra.mxu0 0.0
    %780 = vmatpush.msra.mxu0 %v44
    %781 = vmatmul.f32.gmra.mxu0 %v763
    %v782 = vpop.f32.mrf.mxu0
    %v783 = vadd.f32 0.0, %v782
    %784 = vdwg.mxu0
    %v786 = vsel %vm229, %v607, 0
    %788 = vmatpush.msra.mxu0 0.0
    %789 = vmatpush.msra.mxu0 0.0
    %790 = vmatpush.msra.mxu0 0.0
    %791 = vmatpush.msra.mxu0 0.0
    %792 = vmatpush.msra.mxu0 0.0
    %793 = vmatpush.msra.mxu0 0.0
    %794 = vmatpush.msra.mxu0 0.0
    %795 = vmatpush.msra.mxu0 0.0
    %796 = vmatpush.msra.mxu0 0.0
    %797 = vmatpush.msra.mxu0 0.0
    %798 = vmatpush.msra.mxu0 0.0
    %799 = vmatpush.msra.mxu0 0.0
    %800 = vmatpush.msra.mxu0 0.0
    %801 = vmatpush.msra.mxu0 0.0
    %802 = vmatpush.msra.mxu0 0.0
    %803 = vmatpush.msra.mxu0 %v45
    %804 = vmatmul.f32.gmra.mxu0 %v786
    %v805 = vpop.f32.mrf.mxu0
    %v806 = vadd.f32 0.0, %v805
    %807 = vdwg.mxu0
    %v809 = vsel %vm229, %v633, 0
    %811 = vmatpush.msra.mxu0 0.0
    %812 = vmatpush.msra.mxu0 0.0
    %813 = vmatpush.msra.mxu0 0.0
    %814 = vmatpush.msra.mxu0 0.0
    %815 = vmatpush.msra.mxu0 0.0
    %816 = vmatpush.msra.mxu0 0.0
    %817 = vmatpush.msra.mxu0 0.0
    %818 = vmatpush.msra.mxu0 0.0
    %819 = vmatpush.msra.mxu0 0.0
    %820 = vmatpush.msra.mxu0 0.0
    %821 = vmatpush.msra.mxu0 0.0
    %822 = vmatpush.msra.mxu0 0.0
    %823 = vmatpush.msra.mxu0 0.0
    %824 = vmatpush.msra.mxu0 0.0
    %825 = vmatpush.msra.mxu0 0.0
    %826 = vmatpush.msra.mxu0 %v46
    %827 = vmatmul.f32.gmra.mxu0 %v809
    %v828 = vpop.f32.mrf.mxu0
    %v829 = vadd.f32 0.0, %v828
    %830 = vdwg.mxu0
    %v832 = vsel %vm229, %v659, 0
    %834 = vmatpush.msra.mxu0 0.0
    %835 = vmatpush.msra.mxu0 0.0
    %836 = vmatpush.msra.mxu0 0.0
    %837 = vmatpush.msra.mxu0 0.0
    %838 = vmatpush.msra.mxu0 0.0
    %839 = vmatpush.msra.mxu0 0.0
    %840 = vmatpush.msra.mxu0 0.0
    %841 = vmatpush.msra.mxu0 0.0
    %842 = vmatpush.msra.mxu0 0.0
    %843 = vmatpush.msra.mxu0 0.0
    %844 = vmatpush.msra.mxu0 0.0
    %845 = vmatpush.msra.mxu0 0.0
    %846 = vmatpush.msra.mxu0 0.0
    %847 = vmatpush.msra.mxu0 0.0
    %848 = vmatpush.msra.mxu0 0.0
    %849 = vmatpush.msra.mxu0 %v43
    %850 = vmatmul.f32.gmra.mxu0 %v832
    %v851 = vpop.f32.mrf.mxu0
    %v852 = vadd.f32 0.0, %v851
    %853 = vdwg.mxu0
    %v855 = vsel %vm229, %v685, 0
    %857 = vmatpush.msra.mxu0 0.0
    %858 = vmatpush.msra.mxu0 0.0
    %859 = vmatpush.msra.mxu0 0.0
    %860 = vmatpush.msra.mxu0 0.0
    %861 = vmatpush.msra.mxu0 0.0
    %862 = vmatpush.msra.mxu0 0.0
    %863 = vmatpush.msra.mxu0 0.0
    %864 = vmatpush.msra.mxu0 0.0
    %865 = vmatpush.msra.mxu0 0.0
    %866 = vmatpush.msra.mxu0 0.0
    %867 = vmatpush.msra.mxu0 0.0
    %868 = vmatpush.msra.mxu0 0.0
    %869 = vmatpush.msra.mxu0 0.0
    %870 = vmatpush.msra.mxu0 0.0
    %871 = vmatpush.msra.mxu0 0.0
    %872 = vmatpush.msra.mxu0 %v44
    %873 = vmatmul.f32.gmra.mxu0 %v855
    %v874 = vpop.f32.mrf.mxu0
    %v875 = vadd.f32 0.0, %v874
    %876 = vdwg.mxu0
    %v878 = vsel %vm229, %v711, 0
    %880 = vmatpush.msra.mxu0 0.0
    %881 = vmatpush.msra.mxu0 0.0
    %882 = vmatpush.msra.mxu0 0.0
    %883 = vmatpush.msra.mxu0 0.0
    %884 = vmatpush.msra.mxu0 0.0
    %885 = vmatpush.msra.mxu0 0.0
    %886 = vmatpush.msra.mxu0 0.0
    %887 = vmatpush.msra.mxu0 0.0
    %888 = vmatpush.msra.mxu0 0.0
    %889 = vmatpush.msra.mxu0 0.0
    %890 = vmatpush.msra.mxu0 0.0
    %891 = vmatpush.msra.mxu0 0.0
    %892 = vmatpush.msra.mxu0 0.0
    %893 = vmatpush.msra.mxu0 0.0
    %894 = vmatpush.msra.mxu0 0.0
    %895 = vmatpush.msra.mxu0 %v45
    %896 = vmatmul.f32.gmra.mxu0 %v878
    %v897 = vpop.f32.mrf.mxu0
    %v898 = vadd.f32 0.0, %v897
    %899 = vdwg.mxu0
    %v901 = vsel %vm229, %v737, 0
    %903 = vmatpush.msra.mxu0 0.0
    %904 = vmatpush.msra.mxu0 0.0
    %905 = vmatpush.msra.mxu0 0.0
    %906 = vmatpush.msra.mxu0 0.0
    %907 = vmatpush.msra.mxu0 0.0
    %908 = vmatpush.msra.mxu0 0.0
    %909 = vmatpush.msra.mxu0 0.0
    %910 = vmatpush.msra.mxu0 0.0
    %911 = vmatpush.msra.mxu0 0.0
    %912 = vmatpush.msra.mxu0 0.0
    %913 = vmatpush.msra.mxu0 0.0
    %914 = vmatpush.msra.mxu0 0.0
    %915 = vmatpush.msra.mxu0 0.0
    %916 = vmatpush.msra.mxu0 0.0
    %917 = vmatpush.msra.mxu0 0.0
    %918 = vmatpush.msra.mxu0 %v46
    %919 = vmatmul.f32.gmra.mxu0 %v901
    %v920 = vpop.f32.mrf.mxu0
    %v921 = vadd.f32 0.0, %v920
    %922 = vdwg.mxu0
    %v923 = vld [vmem:[%s4] sm:$0x1]
    %v924 = vsel %vm59, %v760, 0.0
    %v925 = vsel %vm59, %v783, 0.0
    %v926 = vadd.f32 %v924, %v925
    %v927 = vsel %vm59, %v806, 0.0
    %v928 = vadd.f32 %v926, %v927
    %v929 = vsel %vm59, %v829, 0.0
    %v930 = vadd.f32 %v928, %v929
    %v931 = vsel %vm59, %v852, 0.0
    %v932 = vsel %vm59, %v875, 0.0
    %v933 = vadd.f32 %v931, %v932
    %v934 = vsel %vm59, %v898, 0.0
    %v935 = vadd.f32 %v933, %v934
    %v936 = vsel %vm59, %v921, 0.0
    %v937 = vadd.f32 %v935, %v936
    %v939 = vperm.slane %v923, 0
    %v941 = vadd.f32 %v930, %v939
    %v942 = vadd.f32 %v937, %v939
    %943 = vst.msk [vmem:[#allocation2] sm:$0xff] %vm59, %v941
    %944 = vst.msk [vmem:[#allocation2 + $0x8] sm:$0xff] %vm59, %v942
    // Predicated region
    $region22: #{tpu_custom_call.1} parent=1 // pred_check
      _
    $region23: #{tpu_custom_call.1} parent=1 // pred_check_branch
      %946 = sbr.rel (0) target = $region25
    $region24: #{tpu_custom_call.1} parent=1 // pred_region
      %948 = vsyncadd [#allocation3], 0
      %s949 = sshll.u32 [#allocation2], 4
      %s950 = int_to_ptr.vmem [resolvable:$true] %s949
      %s951 = sshll.u32 %s5, 4
      %s952 = int_to_ptr.hbm [resolvable:$true] %s951
      %957 = dma.vmem_to_hbm [thread:$0]  %s950, 256, %s952, [#allocation3], 128, 128, 8
    $region25: #{tpu_custom_call.1} parent=1 // pred_fallthru
      _
    // Predicated region
    $region26: #{tpu_custom_call.1} parent=1 // pred_check
      _
    $region27: #{tpu_custom_call.1} parent=1 // pred_check_branch
      %959 = sbr.rel (0) target = $region29
    $region28: #{tpu_custom_call.1} parent=1 // pred_region
      %961 = dma.done [#allocation3], 256
    $region29: #{tpu_custom_call.1} parent=1 // pred_fallthru
      _
    %962 = vsyncpa [#allocation3], 1

</llo_original>
